<compile_context>
chip_gen: v5e
topology: v5e:2x2
jax: 0.10.0
libtpu: 0.0.40
codegen_flags: <defaults>
</compile_context>

<pallas_src>
import math

import numpy as np
import jax
import jax.numpy as jnp
from jax.experimental import pallas as pl
from jax.experimental.pallas import tpu as pltpu


# ----------------------------------------------------------------------------
# Deterministic parameter construction (same math as the PyTorch module).
# ----------------------------------------------------------------------------
def speed_perturb_filter(src_sr: int, dst_sr: int,
                         cutoff_ratio: float = 0.95,
                         num_zeros: int = 64) -> jnp.ndarray:
    if src_sr == dst_sr:
        raise ValueError(f"src_sr should not be equal to dst_sr: {src_sr}/{dst_sr}")
    gcd = math.gcd(src_sr, dst_sr)
    src_sr = src_sr // gcd
    dst_sr = dst_sr // gcd
    if src_sr == 1 or dst_sr == 1:
        raise ValueError("do not support integer downsample/upsample")
    zeros_per_block = min(src_sr, dst_sr) * cutoff_ratio
    padding = 1 + int(num_zeros / zeros_per_block)
    times = (np.arange(dst_sr)[:, None, None] / float(dst_sr)
             - np.arange(src_sr)[None, :, None] / float(src_sr)
             - np.arange(2 * padding + 1)[None, None, :] + padding)
    window = (np.heaviside(1 - np.abs(times / padding), 0.0)
              * (0.5 + 0.5 * np.cos(times / padding * math.pi)))
    weight = np.sinc(times * zeros_per_block) * window * zeros_per_block / float(src_sr)
    return jnp.asarray(weight, dtype=jnp.float32)


# ----------------------------------------------------------------------------
# Pallas kernel: one fused (D, K*C) x (K*C, T_tile) matmul per time tile.
# ----------------------------------------------------------------------------
def _make_conv_kernel(C: int, K: int, T_tile: int):
    def kernel(xm_ref, xh_ref, w_ref, o_ref, im_ref):
        # xm_ref: (T_tile, C)  main time-major slab of the padded waveform
        # xh_ref: (HALO,   C)  halo rows (receptive-field overlap, HALO >= K-1)
        # w_ref : (D, K*C)     flattened filter, W2[d, k*C + c] = w[d, c, k]
        # o_ref : (D, T_tile)  lane-dense output tile
        # im_ref: (K*C, T_tile) VMEM scratch for the im2col stack
        slab = jnp.concatenate([xm_ref[...], xh_ref[...]], axis=0)  # (T_tile+HALO, C)
        # time-major -> channel-major once per tile, in VMEM (no HBM pass).
        xc = slab.T                                                 # (C, T_tile+HALO)
        # im2col: K lane-shifted copies of xc stacked along sublanes.
        for k in range(K):                                          # small static unroll
            im_ref[k * C:(k + 1) * C, :] = xc[:, k:k + T_tile]
        # single fused MXU matmul, contraction depth K*C, f32 accumulation.
        o_ref[...] = jnp.dot(w_ref[...], im_ref[...],
                             preferred_element_type=jnp.float32).astype(o_ref.dtype)
    return kernel


def perturb_speed(wav: jnp.ndarray, weight: jnp.ndarray, *,
                  tile_t: int = 2048,
                  compute_dtype=jnp.float32,
                  interleave_output: bool = True) -> jnp.ndarray:
    """
    Args:
        wav:    (N, S) float
        weight: (D=dst_sr, C=src_sr, K) float32
    Returns:
        (N, (S // C) * D) float32   (or (N, D, T) if interleave_output=False)
    """
    if wav.ndim == 1:
        wav = wav[None, :]
    D, C, K = (int(d) for d in weight.shape)
    N, S = wav.shape
    T = S // C
    if T == 0:
        raise RuntimeError(f"Input wav is too short to be perturbed, length = {S}")
    P = (K - 1) // 2

    # Lane-dense time tile (multiple of 128 output samples), clamped for short inputs.
    t128 = ((T + 127) // 128) * 128
    T_tile = max(128, min((tile_t // 128) * 128, t128))
    n_t = -(-T // T_tile)
    T_grid = n_t * T_tile

    # Halo covering the receptive-field overlap between adjacent time tiles.
    HALO = 8
    while HALO < K - 1:
        HALO *= 2
    assert HALO <= T_tile and T_tile % HALO == 0, (HALO, T_tile)

    # Single fused prep pass: crop -> (free) block reshape -> zero-pad the time axis.
    # (No channel-major transpose in XLA; the relayout happens in-kernel.)
    x = wav[:, :T * C].astype(compute_dtype).reshape(N, T, C)
    XP = jnp.pad(x, ((0, 0), (P, T_grid + HALO - P - T), (0, 0)))     # (N, T_grid+HALO, C)

    # Flattened filter: W2[d, k*C + c] = w[d, c, k]   (tiny, done once per call).
    W2 = jnp.transpose(weight.astype(compute_dtype), (0, 2, 1)).reshape(D, K * C)

    kernel = _make_conv_kernel(C=C, K=K, T_tile=T_tile)

    # NOTE: the (1, T_tile, C) time-major block keeps HBM reads contiguous; the
    # narrow (C=10) lane dim only costs VMEM padding, not HBM traffic.
    out = pl.pallas_call(
        kernel,
        out_shape=jax.ShapeDtypeStruct((N, D, T_grid), jnp.float32),
        grid=(N, n_t),
        in_specs=[
            pl.BlockSpec((None, T_tile, C), lambda n, j: (n, j, 0)),
            pl.BlockSpec((None, HALO, C),
                         lambda n, j: (n, (j + 1) * (T_tile // HALO), 0)),
            pl.BlockSpec((D, K * C), lambda n, j: (0, 0)),
        ],
        out_specs=pl.BlockSpec((None, D, T_tile), lambda n, j: (n, 0, j)),
        scratch_shapes=[pltpu.VMEM((K * C, T_tile), compute_dtype)],
        compiler_params=pltpu.CompilerParams(
            dimension_semantics=("parallel", "parallel")),
    )(XP, XP, W2)

    out = out[:, :, :T]                     # crop the 128-padded time axis
    if not interleave_output:
        return out                          # channel-major (N, D, T): skips a full HBM pass
    # Interleave to match torch: (N, D, T) -> (N, T, D) -> (N, T*D).
    return jnp.transpose(out, (0, 2, 1)).reshape(N, T * D)


# ----------------------------------------------------------------------------
# Module wrapper.
# ----------------------------------------------------------------------------
class SpeedPerturb:
    def __init__(self, sr: int = 16000, perturb: str = "0.9,1.1") -> None:
        self.sr = sr
        self.factor_str = perturb
        dst_sr = [int(float(f) * sr) for f in perturb.split(",")]
        if not len(dst_sr):
            raise ValueError("No perturb options for doing speed perturb")
        self.weights = [speed_perturb_filter(sr, fs) for fs in dst_sr if fs != sr]
        self.last_weight = None
        self.training = True

    def output_length(self, inp_len):
        if self.last_weight is None or inp_len is None:
            return inp_len
        D, C, _ = self.last_weight.shape
        return inp_len // C * D

    def forward(self, wav: jnp.ndarray, choice: int = 0) -> jnp.ndarray:
        # TODO(synk): th.randint perturb-factor selection is host-side RNG in the
        # original module; exposed here as a deterministic `choice` argument.
        if wav.ndim == 1:
            wav = wav[None, :]
        self.last_weight = None
        if not self.training:
            return jnp.squeeze(wav, 0) if wav.shape[0] == 1 else wav
        self.last_weight = self.weights[choice]
        out = perturb_speed(wav, self.last_weight)
        return jnp.squeeze(out, 0) if out.shape[0] == 1 else out


# ----------------------------------------------------------------------------
# Smoke test + numeric check against a pure-JAX reference.
# ----------------------------------------------------------------------------
def _reference(wav: jnp.ndarray, w: jnp.ndarray) -> jnp.ndarray:
    D, C, K = w.shape
    N, S = wav.shape
    T = S // C
    P = (K - 1) // 2
    x = jnp.transpose(wav[:, :T * C].astype(jnp.float32).reshape(N, T, C), (0, 2, 1))
    xp = jnp.pad(x, ((0, 0), (0, 0), (P, P)))
    ref = jnp.zeros((N, D, T), jnp.float32)
    for k in range(K):
        ref = ref + jnp.einsum("dc,nct->ndt", w[:, :, k], xp[:, :, k:k + T])
    return jnp.transpose(ref, (0, 2, 1)).reshape(N, -1)


if __name__ == "__main__":
    key = jax.random.PRNGKey(0)
    N = 2
    # src_sr reduces to 10; S chosen so num_blocks = 128 with a few leftover
    # samples to exercise the truncation path.
    S = 10 * 128 + 3
    wav = jax.random.normal(key, (N, S), dtype=jnp.float32)

    mod = SpeedPerturb(sr=16000, perturb="0.9,1.1")

    ok = True
    for choice in range(len(mod.weights)):          # factor 0.9 and 1.1
        out = jax.block_until_ready(mod.forward(wav, choice=choice))
        w = mod.weights[choice]
        D, C, _ = w.shape
        T = S // C
        ref = _reference(wav, w)
        assert out.shape == (N, T * D), (out.shape, (N, T * D))
        ok = ok and bool(jnp.allclose(out, ref, atol=1e-4, rtol=1e-4))

    assert ok
    print("KERNEL_OK")
</pallas_src>

<mosaic_0001>
module attributes {stable_mosaic.version = 11 : i64} {
  func.func @kernel(%arg0: i32, %arg1: i32, %arg2: memref<1x128x10xf32, #tpu.memory_space<vmem>>, %arg3: memref<1x16x10xf32, #tpu.memory_space<vmem>>, %arg4: memref<9x170xf32, #tpu.memory_space<vmem>>, %arg5: memref<1x9x128xf32, #tpu.memory_space<vmem>>, %arg6: memref<170x128xf32, #tpu.memory_space<vmem>>) attributes {dimension_semantics = [#tpu.dimension_semantics<parallel>, #tpu.dimension_semantics<parallel>], iteration_bounds = array<i64: 2, 1>, scalar_prefetch = 0 : i64, scratch_operands = 1 : i64, tpu.core_type = #tpu.core_type<tc>, window_params = [{transform_indices = @transform_0, window_bounds = array<i64: 1, 128, 10>}, {transform_indices = @transform_1, window_bounds = array<i64: 1, 16, 10>}, {pipeline_mode = #tpu.pipeline_mode<synchronous>, transform_indices = @transform_2, window_bounds = array<i64: 9, 170>}, {transform_indices = @transform_3, window_bounds = array<i64: 1, 9, 128>}]} {
    %c0 = arith.constant 0 : index
    %c0_0 = arith.constant 0 : index
    %c0_1 = arith.constant 0 : index
    %0 = vector.load %arg2[%c0, %c0_0, %c0_1] : memref<1x128x10xf32, #tpu.memory_space<vmem>>, vector<1x128x10xf32>
    %1 = vector.shape_cast %0 : vector<1x128x10xf32> to vector<128x10xf32>
    %c0_2 = arith.constant 0 : index
    %c0_3 = arith.constant 0 : index
    %c0_4 = arith.constant 0 : index
    %2 = vector.load %arg3[%c0_2, %c0_3, %c0_4] : memref<1x16x10xf32, #tpu.memory_space<vmem>>, vector<1x16x10xf32>
    %3 = vector.shape_cast %2 : vector<1x16x10xf32> to vector<16x10xf32>
    %4 = tpu.concatenate %1, %3 in 0 : vector<128x10xf32>, vector<16x10xf32> -> vector<144x10xf32>
    %5 = tpu.transpose %4, [1, 0] : vector<144x10xf32> -> vector<10x144xf32>
    %6 = vector.extract_strided_slice %5 {offsets = [0, 0], sizes = [10, 128], strides = [1, 1]} : vector<10x144xf32> to vector<10x128xf32>
    %c0_5 = arith.constant 0 : index
    %c0_6 = arith.constant 0 : index
    %7 = vector.load %arg6[%c0_5, %c0_6] : memref<170x128xf32, #tpu.memory_space<vmem>>, vector<10x128xf32>
    tpu.vector_store %arg6[%c0_5, %c0_6], %6 {strides = array<i32>} : memref<170x128xf32, #tpu.memory_space<vmem>>, vector<10x128xf32>,
    %8 = vector.extract_strided_slice %5 {offsets = [0, 1], sizes = [10, 128], strides = [1, 1]} : vector<10x144xf32> to vector<10x128xf32>
    %c10 = arith.constant 10 : index
    %c0_7 = arith.constant 0 : index
    %9 = vector.load %arg6[%c10, %c0_7] : memref<170x128xf32, #tpu.memory_space<vmem>>, vector<10x128xf32>
    tpu.vector_store %arg6[%c10, %c0_7], %8 {strides = array<i32>} : memref<170x128xf32, #tpu.memory_space<vmem>>, vector<10x128xf32>,
    %10 = vector.extract_strided_slice %5 {offsets = [0, 2], sizes = [10, 128], strides = [1, 1]} : vector<10x144xf32> to vector<10x128xf32>
    %c20 = arith.constant 20 : index
    %c0_8 = arith.constant 0 : index
    %11 = vector.load %arg6[%c20, %c0_8] : memref<170x128xf32, #tpu.memory_space<vmem>>, vector<10x128xf32>
    tpu.vector_store %arg6[%c20, %c0_8], %10 {strides = array<i32>} : memref<170x128xf32, #tpu.memory_space<vmem>>, vector<10x128xf32>,
    %12 = vector.extract_strided_slice %5 {offsets = [0, 3], sizes = [10, 128], strides = [1, 1]} : vector<10x144xf32> to vector<10x128xf32>
    %c30 = arith.constant 30 : index
    %c0_9 = arith.constant 0 : index
    %13 = vector.load %arg6[%c30, %c0_9] : memref<170x128xf32, #tpu.memory_space<vmem>>, vector<10x128xf32>
    tpu.vector_store %arg6[%c30, %c0_9], %12 {strides = array<i32>} : memref<170x128xf32, #tpu.memory_space<vmem>>, vector<10x128xf32>,
    %14 = vector.extract_strided_slice %5 {offsets = [0, 4], sizes = [10, 128], strides = [1, 1]} : vector<10x144xf32> to vector<10x128xf32>
    %c40 = arith.constant 40 : index
    %c0_10 = arith.constant 0 : index
    %15 = vector.load %arg6[%c40, %c0_10] : memref<170x128xf32, #tpu.memory_space<vmem>>, vector<10x128xf32>
    tpu.vector_store %arg6[%c40, %c0_10], %14 {strides = array<i32>} : memref<170x128xf32, #tpu.memory_space<vmem>>, vector<10x128xf32>,
    %16 = vector.extract_strided_slice %5 {offsets = [0, 5], sizes = [10, 128], strides = [1, 1]} : vector<10x144xf32> to vector<10x128xf32>
    %c50 = arith.constant 50 : index
    %c0_11 = arith.constant 0 : index
    %17 = vector.load %arg6[%c50, %c0_11] : memref<170x128xf32, #tpu.memory_space<vmem>>, vector<10x128xf32>
    tpu.vector_store %arg6[%c50, %c0_11], %16 {strides = array<i32>} : memref<170x128xf32, #tpu.memory_space<vmem>>, vector<10x128xf32>,
    %18 = vector.extract_strided_slice %5 {offsets = [0, 6], sizes = [10, 128], strides = [1, 1]} : vector<10x144xf32> to vector<10x128xf32>
    %c60 = arith.constant 60 : index
    %c0_12 = arith.constant 0 : index
    %19 = vector.load %arg6[%c60, %c0_12] : memref<170x128xf32, #tpu.memory_space<vmem>>, vector<10x128xf32>
    tpu.vector_store %arg6[%c60, %c0_12], %18 {strides = array<i32>} : memref<170x128xf32, #tpu.memory_space<vmem>>, vector<10x128xf32>,
    %20 = vector.extract_strided_slice %5 {offsets = [0, 7], sizes = [10, 128], strides = [1, 1]} : vector<10x144xf32> to vector<10x128xf32>
    %c70 = arith.constant 70 : index
    %c0_13 = arith.constant 0 : index
    %21 = vector.load %arg6[%c70, %c0_13] : memref<170x128xf32, #tpu.memory_space<vmem>>, vector<10x128xf32>
    tpu.vector_store %arg6[%c70, %c0_13], %20 {strides = array<i32>} : memref<170x128xf32, #tpu.memory_space<vmem>>, vector<10x128xf32>,
    %22 = vector.extract_strided_slice %5 {offsets = [0, 8], sizes = [10, 128], strides = [1, 1]} : vector<10x144xf32> to vector<10x128xf32>
    %c80 = arith.constant 80 : index
    %c0_14 = arith.constant 0 : index
    %23 = vector.load %arg6[%c80, %c0_14] : memref<170x128xf32, #tpu.memory_space<vmem>>, vector<10x128xf32>
    tpu.vector_store %arg6[%c80, %c0_14], %22 {strides = array<i32>} : memref<170x128xf32, #tpu.memory_space<vmem>>, vector<10x128xf32>,
    %24 = vector.extract_strided_slice %5 {offsets = [0, 9], sizes = [10, 128], strides = [1, 1]} : vector<10x144xf32> to vector<10x128xf32>
    %c90 = arith.constant 90 : index
    %c0_15 = arith.constant 0 : index
    %25 = vector.load %arg6[%c90, %c0_15] : memref<170x128xf32, #tpu.memory_space<vmem>>, vector<10x128xf32>
    tpu.vector_store %arg6[%c90, %c0_15], %24 {strides = array<i32>} : memref<170x128xf32, #tpu.memory_space<vmem>>, vector<10x128xf32>,
    %26 = vector.extract_strided_slice %5 {offsets = [0, 10], sizes = [10, 128], strides = [1, 1]} : vector<10x144xf32> to vector<10x128xf32>
    %c100 = arith.constant 100 : index
    %c0_16 = arith.constant 0 : index
    %27 = vector.load %arg6[%c100, %c0_16] : memref<170x128xf32, #tpu.memory_space<vmem>>, vector<10x128xf32>
    tpu.vector_store %arg6[%c100, %c0_16], %26 {strides = array<i32>} : memref<170x128xf32, #tpu.memory_space<vmem>>, vector<10x128xf32>,
    %28 = vector.extract_strided_slice %5 {offsets = [0, 11], sizes = [10, 128], strides = [1, 1]} : vector<10x144xf32> to vector<10x128xf32>
    %c110 = arith.constant 110 : index
    %c0_17 = arith.constant 0 : index
    %29 = vector.load %arg6[%c110, %c0_17] : memref<170x128xf32, #tpu.memory_space<vmem>>, vector<10x128xf32>
    tpu.vector_store %arg6[%c110, %c0_17], %28 {strides = array<i32>} : memref<170x128xf32, #tpu.memory_space<vmem>>, vector<10x128xf32>,
    %30 = vector.extract_strided_slice %5 {offsets = [0, 12], sizes = [10, 128], strides = [1, 1]} : vector<10x144xf32> to vector<10x128xf32>
    %c120 = arith.constant 120 : index
    %c0_18 = arith.constant 0 : index
    %31 = vector.load %arg6[%c120, %c0_18] : memref<170x128xf32, #tpu.memory_space<vmem>>, vector<10x128xf32>
    tpu.vector_store %arg6[%c120, %c0_18], %30 {strides = array<i32>} : memref<170x128xf32, #tpu.memory_space<vmem>>, vector<10x128xf32>,
    %32 = vector.extract_strided_slice %5 {offsets = [0, 13], sizes = [10, 128], strides = [1, 1]} : vector<10x144xf32> to vector<10x128xf32>
    %c130 = arith.constant 130 : index
    %c0_19 = arith.constant 0 : index
    %33 = vector.load %arg6[%c130, %c0_19] : memref<170x128xf32, #tpu.memory_space<vmem>>, vector<10x128xf32>
    tpu.vector_store %arg6[%c130, %c0_19], %32 {strides = array<i32>} : memref<170x128xf32, #tpu.memory_space<vmem>>, vector<10x128xf32>,
    %34 = vector.extract_strided_slice %5 {offsets = [0, 14], sizes = [10, 128], strides = [1, 1]} : vector<10x144xf32> to vector<10x128xf32>
    %c140 = arith.constant 140 : index
    %c0_20 = arith.constant 0 : index
    %35 = vector.load %arg6[%c140, %c0_20] : memref<170x128xf32, #tpu.memory_space<vmem>>, vector<10x128xf32>
    tpu.vector_store %arg6[%c140, %c0_20], %34 {strides = array<i32>} : memref<170x128xf32, #tpu.memory_space<vmem>>, vector<10x128xf32>,
    %36 = vector.extract_strided_slice %5 {offsets = [0, 15], sizes = [10, 128], strides = [1, 1]} : vector<10x144xf32> to vector<10x128xf32>
    %c150 = arith.constant 150 : index
    %c0_21 = arith.constant 0 : index
    %37 = vector.load %arg6[%c150, %c0_21] : memref<170x128xf32, #tpu.memory_space<vmem>>, vector<10x128xf32>
    tpu.vector_store %arg6[%c150, %c0_21], %36 {strides = array<i32>} : memref<170x128xf32, #tpu.memory_space<vmem>>, vector<10x128xf32>,
    %38 = vector.extract_strided_slice %5 {offsets = [0, 16], sizes = [10, 128], strides = [1, 1]} : vector<10x144xf32> to vector<10x128xf32>
    %c160 = arith.constant 160 : index
    %c0_22 = arith.constant 0 : index
    %39 = vector.load %arg6[%c160, %c0_22] : memref<170x128xf32, #tpu.memory_space<vmem>>, vector<10x128xf32>
    tpu.vector_store %arg6[%c160, %c0_22], %38 {strides = array<i32>} : memref<170x128xf32, #tpu.memory_space<vmem>>, vector<10x128xf32>,
    %c0_23 = arith.constant 0 : index
    %c0_24 = arith.constant 0 : index
    %40 = vector.load %arg4[%c0_23, %c0_24] : memref<9x170xf32, #tpu.memory_space<vmem>>, vector<9x170xf32>
    %c0_25 = arith.constant 0 : index
    %c0_26 = arith.constant 0 : index
    %41 = vector.load %arg6[%c0_25, %c0_26] : memref<170x128xf32, #tpu.memory_space<vmem>>, vector<170x128xf32>
    %cst = arith.constant dense<0.000000e+00> : vector<9x128xf32>
    %42 = tpu.matmul %40, %41, %cst {dimension_numbers = #tpu.dot_dimension_numbers<[1], [0], [0], [1], [0, 0, 1, 1], [], []>} : vector<9x170xf32>, vector<170x128xf32>, vector<9x128xf32> -> vector<9x128xf32>
    %c0_27 = arith.constant 0 : index
    %c0_28 = arith.constant 0 : index
    %c0_29 = arith.constant 0 : index
    %43 = vector.load %arg5[%c0_27, %c0_28, %c0_29] : memref<1x9x128xf32, #tpu.memory_space<vmem>>, vector<1x9x128xf32>
    %44 = vector.shape_cast %43 : vector<1x9x128xf32> to vector<9x128xf32>
    %45 = vector.shape_cast %42 : vector<9x128xf32> to vector<1x9x128xf32>
    tpu.vector_store %arg5[%c0_27, %c0_28, %c0_29], %45 {strides = array<i32>} : memref<1x9x128xf32, #tpu.memory_space<vmem>>, vector<1x9x128xf32>,
    return
  }
  func.func @transform_0(%arg0: i32, %arg1: i32) -> (i32, i32, i32) {
    %c0_i32 = arith.constant 0 : i32
    %c0_i32_0 = arith.constant 0 : i32
    return %arg0, %arg1, %c0_i32 : i32, i32, i32
  }
  func.func @transform_1(%arg0: i32, %arg1: i32) -> (i32, i32, i32) {
    %c1_i32 = arith.constant 1 : i32
    %0 = arith.addi %arg1, %c1_i32 : i32
    %c8_i32 = arith.constant 8 : i32
    %1 = arith.muli %0, %c8_i32 : i32
    %c0_i32 = arith.constant 0 : i32
    %c0_i32_0 = arith.constant 0 : i32
    return %arg0, %1, %c0_i32 : i32, i32, i32
  }
  func.func @transform_2(%arg0: i32, %arg1: i32) -> (i32, i32) {
    %c0_i32 = arith.constant 0 : i32
    %c0_i32_0 = arith.constant 0 : i32
    %c0_i32_1 = arith.constant 0 : i32
    return %c0_i32, %c0_i32_0 : i32, i32
  }
  func.func @transform_3(%arg0: i32, %arg1: i32) -> (i32, i32, i32) {
    %c0_i32 = arith.constant 0 : i32
    %c0_i32_0 = arith.constant 0 : i32
    return %arg0, %c0_i32, %arg1 : i32, i32, i32
  }
}

</mosaic_0001>

<llo_original>
// kernel: tpu_custom_call.1
$region0: #{tpu_custom_call.1}
  #allocation0 [shape = 'u32[]', space=smem, size = 0x4, offset = 0x4, fixed_abs, tag = 'smem constant byte address 0x4 - core index']
  #allocation1 [shape = 'u32[72,128]{1,0:T(1,128)}', space=vmem, size = 0x9000, scoped, tag = 'internal scratch']
  #allocation2 [shape = 'f32[170,128]{1,0:T(8,128)}', space=vmem, size = 0x16000, scoped, tag = 'scratch operand']
  %s0 = inlined_call_operand.vmem [shape: f32[2,144,10], index: 0, kind: input, shape index: {}]
  %s1 = inlined_call_operand.vmem [shape: f32[2,144,10], index: 1, kind: input, shape index: {}]
  %s2 = inlined_call_operand.vmem [shape: f32[9,170], index: 2, kind: input, shape index: {}]
  %s3 = inlined_call_operand.vmem [shape: f32[2,9,128], index: 3, kind: output, shape index: {}]
  %s4 = sld [smem:[#allocation0]]
  $region45: #{tpu_custom_call.1} parent=0
    _
  %s6 = ssub.s32 1, %s4
  %s7 = scalar_select 0, %s6, %s4
  loop: start=0, step=1, limit=4
  $region2: #{tpu_custom_call.1} parent=0 // loop_pre_header
    _
  $region3: #{tpu_custom_call.1} parent=0 // loop_header
    %s9 = sphi 0, %s13
    %p10 = scmp.ge.s32.totalorder %s9, 4
    %s16 = sphi 0, %s28
    %s17 = sphi 0, %s24
    %s18 = sphi 0, %s16
    %s19 = sphi 0, %s17
    %s20 = sphi 0, %s18
    %s21 = sphi 0, %s19
    %s33 = sphi 0, %s35
    %s36 = sphi 0, %s33
    %s37 = sphi 0, %s36
    %s53 = sphi 0, %s37
    %s65 = sphi 0, %s67
    %s68 = sphi 0, %s65
    %s69 = sphi 0, %s68
    %s85 = sphi 0, %s69
    %s89 = sphi 0, %s89
    %s91 = sphi 0, %s89
    %s92 = sphi 0, %s91
    %s106 = sphi 0, %s92
    %s114 = sphi 0, %s116
    %s117 = sphi 0, %s114
    %s118 = sphi 0, %s117
    %s134 = sphi 0, %s118
  $region4: #{tpu_custom_call.1} parent=0 // loop_header_branch
    %12 = sbr.rel (%p10) target = $region8
  $region5: #{tpu_custom_call.1} parent=0 // loop_body
    %s14 = ssub.s32 %s9, 1
    %s15 = ssub.s32 %s9, 2
    %s22 = sadd.s32 1, %s17
    %p23 = scmp.ge.s32.totalorder %s22, 1
    %s24 = scalar_select %p23, 0, %s22
    %s25 = sadd.s32 1, %s16
    %s26 = scalar_select %p23, %s25, %s16
    %p27 = scmp.ge.s32.totalorder %s26, 2
    %s28 = scalar_select %p27, 0, %s26
    %s29 = ssub.s32 %s16, %s28
    %s30 = ssub.s32 %s17, %s24
    %s31 = sor.u32 %s29, %s30
    %p32 = scmp.eq.s32.totalorder %s31, 0
    %s34 = sadd.s32 %s33, 1
    %s35 = scalar_select %p32, %s33, %s34
    %p38 = pneg %p32
    %p39 = scmp.eq.s32.totalorder %s9, 1
    %p40 = por %p38, %p39
    %p41 = scmp.ne.s32.totalorder %s33, %s36
    %p42 = scmp.eq.s32.totalorder %s9, 0
    %p43 = por %p41, %p42
    %p44 = scmp.ne.s32.totalorder %s33, %s36
    %p45 = scmp.eq.s32.totalorder %s14, 1
    %p46 = por %p44, %p45
    %p47 = scmp.ne.s32.totalorder %s36, %s37
    %p48 = scmp.eq.s32.totalorder %s14, 0
    %p49 = por %p47, %p48
    %p50 = scmp.ne.s32.totalorder %s36, %s37
    %p51 = scmp.eq.s32.totalorder %s15, 1
    %p52 = por %p50, %p51
    %p54 = scmp.ne.s32.totalorder %s37, %s53
    %p55 = scmp.eq.s32.totalorder %s15, 0
    %p56 = por %p54, %p55
    %s57 = sadd.s32 %s17, 1
    %s58 = smul.u32 %s57, 8
    %s59 = sadd.s32 %s24, 1
    %s60 = smul.u32 %s59, 8
    %s61 = ssub.s32 %s16, %s28
    %s62 = ssub.s32 %s58, %s60
    %s63 = sor.u32 %s61, %s62
    %p64 = scmp.eq.s32.totalorder %s63, 0
    %s66 = sadd.s32 %s65, 1
    %s67 = scalar_select %p64, %s65, %s66
    %p70 = pneg %p64
    %p71 = scmp.eq.s32.totalorder %s9, 1
    %p72 = por %p70, %p71
    %p73 = scmp.ne.s32.totalorder %s65, %s68
    %p74 = scmp.eq.s32.totalorder %s9, 0
    %p75 = por %p73, %p74
    %p76 = scmp.ne.s32.totalorder %s65, %s68
    %p77 = scmp.eq.s32.totalorder %s14, 1
    %p78 = por %p76, %p77
    %p79 = scmp.ne.s32.totalorder %s68, %s69
    %p80 = scmp.eq.s32.totalorder %s14, 0
    %p81 = por %p79, %p80
    %p82 = scmp.ne.s32.totalorder %s68, %s69
    %p83 = scmp.eq.s32.totalorder %s15, 1
    %p84 = por %p82, %p83
    %p86 = scmp.ne.s32.totalorder %s69, %s85
    %p87 = scmp.eq.s32.totalorder %s15, 0
    %p88 = por %p86, %p87
    %s90 = sadd.s32 %s89, 1
    %p93 = scmp.eq.s32.totalorder %s9, 1
    %p94 = scmp.ne.s32.totalorder %s89, %s91
    %p95 = scmp.eq.s32.totalorder %s9, 0
    %p96 = por %p94, %p95
    %p97 = scmp.ne.s32.totalorder %s89, %s91
    %p98 = scmp.eq.s32.totalorder %s14, 1
    %p99 = por %p97, %p98
    %p100 = scmp.ne.s32.totalorder %s91, %s92
    %p101 = scmp.eq.s32.totalorder %s14, 0
    %p102 = por %p100, %p101
    %p103 = scmp.ne.s32.totalorder %s91, %s92
    %p104 = scmp.eq.s32.totalorder %s15, 1
    %p105 = por %p103, %p104
    %p107 = scmp.ne.s32.totalorder %s92, %s106
    %p108 = scmp.eq.s32.totalorder %s15, 0
    %p109 = por %p107, %p108
    %s110 = ssub.s32 %s16, %s28
    %s111 = ssub.s32 %s17, %s24
    %s112 = sor.u32 %s110, %s111
    %p113 = scmp.eq.s32.totalorder %s112, 0
    %s115 = sadd.s32 %s114, 1
    %s116 = scalar_select %p113, %s114, %s115
    %p119 = pneg %p113
    %p120 = scmp.eq.s32.totalorder %s9, 1
    %p121 = por %p119, %p120
    %p122 = scmp.ne.s32.totalorder %s114, %s117
    %p123 = scmp.eq.s32.totalorder %s9, 0
    %p124 = por %p122, %p123
    %p125 = scmp.ne.s32.totalorder %s114, %s117
    %p126 = scmp.eq.s32.totalorder %s14, 1
    %p127 = por %p125, %p126
    %p128 = scmp.ne.s32.totalorder %s117, %s118
    %p129 = scmp.eq.s32.totalorder %s14, 0
    %p130 = por %p128, %p129
    %p131 = scmp.ne.s32.totalorder %s117, %s118
    %p132 = scmp.eq.s32.totalorder %s15, 1
    %p133 = por %p131, %p132
    %p135 = scmp.ne.s32.totalorder %s118, %s134
    %p136 = scmp.eq.s32.totalorder %s15, 0
    %p137 = por %p135, %p136
    %p138 = scmp.le.s32.totalorder 1, %s9
    %p139 = scmp.lt.s32.totalorder %s9, 3
    %p140 = pnand %p138, %p139
    %p141 = pneg %p140
    // Predicated region
    $region9: #{tpu_custom_call.1} parent=5 // pred_check
      _
    $region10: #{tpu_custom_call.1} parent=5 // pred_check_branch
      %143 = sbr.rel (%p140) target = $region12
    $region11: #{tpu_custom_call.1} parent=5 // pred_region
      %s144 = ssub.s32 %s9, 1
      // Predicated region
      $region13: #{tpu_custom_call.1} parent=11 // pred_check
        %p145 = pneg %p102
      $region14: #{tpu_custom_call.1} parent=11 // pred_check_branch
        %147 = sbr.rel (%p145) target = $region16
      $region15: #{tpu_custom_call.1} parent=11 // pred_region
        _
      $region16: #{tpu_custom_call.1} parent=11 // pred_fallthru
        _
    $region12: #{tpu_custom_call.1} parent=5 // pred_fallthru
      _
    %p148 = scmp.lt.s32.totalorder %s9, 2
    // Predicated region
    $region17: #{tpu_custom_call.1} parent=5 // pred_check
      %p149 = pneg %p148
    $region18: #{tpu_custom_call.1} parent=5 // pred_check_branch
      %151 = sbr.rel (%p149) target = $region20
    $region19: #{tpu_custom_call.1} parent=5 // pred_region
      // Predicated region
      $region21: #{tpu_custom_call.1} parent=19 // pred_check
        %p152 = pneg %p43
      $region22: #{tpu_custom_call.1} parent=19 // pred_check_branch
        %154 = sbr.rel (%p152) target = $region24
      $region23: #{tpu_custom_call.1} parent=19 // pred_region
        %s155 = smul.u32 16, %s17
        %s156 = ssub.s32 18, %s155
        %p157 = scmp.lt.s32.totalorder %s156, 16
        %s158 = scalar_select %p157, %s156, 16
        %s159 = smul.u32 8, %s158
        %p160 = scmp.lt.s32.totalorder %s16, 1
        %s161 = scalar_select %p160, %s16, 1
        %p162 = scmp.lt.s32.totalorder %s155, 17
        %s163 = scalar_select %p162, %s155, 17
        %s164 = smul.addr %s161, 18
        %s165 = sadd.s32 %s163, %s164
        %s166 = smul.addr %s165, 8
        %s167 = scalar_lea.vmem %s0, %s166
        %s168 = smul.u32 16, %s17
        %s169 = ssub.s32 18, %s168
        %p170 = scmp.lt.s32.totalorder %s169, 16
        %s171 = scalar_select %p170, %s169, 16
        %s172 = smul.u32 8, %s171
      $region24: #{tpu_custom_call.1} parent=19 // pred_fallthru
        _
      // Predicated region
      $region25: #{tpu_custom_call.1} parent=19 // pred_check
        %p173 = pneg %p75
      $region26: #{tpu_custom_call.1} parent=19 // pred_check_branch
        %175 = sbr.rel (%p173) target = $region28
      $region27: #{tpu_custom_call.1} parent=19 // pred_region
        %s176 = sadd.s32 %s17, 1
        %s177 = smul.u32 %s176, 8
        %s178 = smul.u32 2, %s177
        %p179 = scmp.lt.s32.totalorder %s16, 1
        %s180 = scalar_select %p179, %s16, 1
        %p181 = scmp.lt.s32.totalorder %s178, 17
        %s182 = scalar_select %p181, %s178, 17
        %s183 = smul.addr %s180, 18
        %s184 = sadd.s32 %s182, %s183
        %s185 = smul.addr %s184, 8
        %s186 = scalar_lea.vmem %s1, %s185
        %s187 = sadd.s32 %s17, 1
        %s188 = smul.u32 %s187, 8
        %s189 = smul.u32 2, %s188
      $region28: #{tpu_custom_call.1} parent=19 // pred_fallthru
        _
    $region20: #{tpu_custom_call.1} parent=5 // pred_fallthru
      _
    %p190 = scmp.le.s32.totalorder 1, %s9
    %p191 = scmp.lt.s32.totalorder %s9, 3
    %p192 = pnand %p190, %p191
    %p193 = pneg %p192
    // Predicated region
    $region29: #{tpu_custom_call.1} parent=5 // pred_check
      _
    $region30: #{tpu_custom_call.1} parent=5 // pred_check_branch
      %195 = sbr.rel (%p192) target = $region32
    $region31: #{tpu_custom_call.1} parent=5 // pred_region
      %s196 = ssub.s32 %s9, 1
      %s197 = smul.u32 16, %s19
      %s198 = ssub.s32 18, %s197
      %p199 = scmp.lt.s32.totalorder %s198, 16
      %s200 = scalar_select %p199, %s198, 16
      %s201 = smul.u32 8, %s200
      %p202 = scmp.lt.s32.totalorder %s18, 1
      %s203 = scalar_select %p202, %s18, 1
      %p204 = scmp.lt.s32.totalorder %s197, 17
      %s205 = scalar_select %p204, %s197, 17
      %s206 = smul.addr %s203, 18
      %s207 = sadd.s32 %s205, %s206
      %s208 = smul.addr %s207, 8
      %s209 = scalar_lea.vmem %s0, %s208
      %p210 = pneg %p49
      %p211 = pneg %p46
      %s212 = sadd.s32 %s19, 1
      %s213 = smul.u32 %s212, 8
      %s214 = smul.u32 2, %s213
      %p215 = scmp.lt.s32.totalorder %s18, 1
      %s216 = scalar_select %p215, %s18, 1
      %p217 = scmp.lt.s32.totalorder %s214, 17
      %s218 = scalar_select %p217, %s214, 17
      %s219 = smul.addr %s216, 18
      %s220 = sadd.s32 %s218, %s219
      %s221 = smul.addr %s220, 8
      %s222 = scalar_lea.vmem %s1, %s221
      %p223 = pneg %p81
      %p224 = pneg %p78
      %p225 = pneg %p102
      %p226 = pneg %p99
      %p227 = pneg %p130
      %p228 = pneg %p127
      %p229 = scmp.lt.s32.totalorder %s18, 1
      %s230 = scalar_select %p229, %s18, 1
      %p231 = scmp.lt.s32.totalorder %s19, 0
      %s232 = scalar_select %p231, %s19, 0
      %s233 = smul.addr %s230, 2
      %s234 = sadd.s32 %s232, %s233
      %s235 = smul.addr %s234, 8
      %s236 = scalar_lea.vmem %s3, %s235
      %s237 = smul.u32 16, %s19
      %s238 = ssub.s32 18, %s237
      %p239 = scmp.lt.s32.totalorder %s238, 16
      %s240 = scalar_select %p239, %s238, 16
      %s241 = smul.u32 8, %s240
      %p242 = scmp.lt.s32.totalorder %s18, 1
      %s243 = scalar_select %p242, %s18, 1
      %p244 = scmp.lt.s32.totalorder %s237, 17
      %s245 = scalar_select %p244, %s237, 17
      %s246 = smul.addr %s243, 18
      %s247 = sadd.s32 %s245, %s246
      %s248 = smul.addr %s247, 8
      %s249 = scalar_lea.vmem %s0, %s248
      %s250 = smul.u32 16, %s19
      %s251 = ssub.s32 18, %s250
      %p252 = scmp.lt.s32.totalorder %s251, 16
      %s253 = scalar_select %p252, %s251, 16
      %s254 = smul.u32 8, %s253
      %s255 = sadd.s32 %s19, 1
      %s256 = smul.u32 %s255, 8
      %s257 = smul.u32 2, %s256
      %p258 = scmp.lt.s32.totalorder %s18, 1
      %s259 = scalar_select %p258, %s18, 1
      %p260 = scmp.lt.s32.totalorder %s257, 17
      %s261 = scalar_select %p260, %s257, 17
      %s262 = smul.addr %s259, 18
      %s263 = sadd.s32 %s261, %s262
      %s264 = smul.addr %s263, 8
      %s265 = scalar_lea.vmem %s1, %s264
      %s266 = sadd.s32 %s19, 1
      %s267 = smul.u32 %s266, 8
      %s268 = smul.u32 2, %s267
      %p269 = scmp.lt.s32.totalorder %s18, 1
      %s270 = scalar_select %p269, %s18, 1
      %p271 = scmp.lt.s32.totalorder %s19, 0
      %s272 = scalar_select %p271, %s19, 0
      %s273 = smul.addr %s270, 2
      %s274 = sadd.s32 %s272, %s273
      %s275 = smul.addr %s274, 8
      %s276 = scalar_lea.vmem %s3, %s275
      %v277 = vld [vmem:[%s249] sm:$0xff]
      %v278 = vld [vmem:[%s249 + $0x8] sm:$0xff]
      %v279 = vld [vmem:[%s249 + $0x10] sm:$0xff]
      %v280 = vld [vmem:[%s249 + $0x18] sm:$0xff]
      %v281 = vld [vmem:[%s249 + $0x20] sm:$0xff]
      %v282 = vld [vmem:[%s249 + $0x28] sm:$0xff]
      %v283 = vld [vmem:[%s249 + $0x30] sm:$0xff]
      %v284 = vld [vmem:[%s249 + $0x38] sm:$0xff]
      %v285 = vld [vmem:[%s249 + $0x40] sm:$0xff]
      %v286 = vld [vmem:[%s249 + $0x48] sm:$0xff]
      %v287 = vld [vmem:[%s249 + $0x50] sm:$0xff]
      %v288 = vld [vmem:[%s249 + $0x58] sm:$0xff]
      %v289 = vld [vmem:[%s249 + $0x60] sm:$0xff]
      %v290 = vld [vmem:[%s249 + $0x68] sm:$0xff]
      %v291 = vld [vmem:[%s249 + $0x70] sm:$0xff]
      %v292 = vld [vmem:[%s249 + $0x78] sm:$0xff]
      %v293 = vld [vmem:[%s265] sm:$0xff]
      %v294 = vld [vmem:[%s265 + $0x8] sm:$0xff]
      %295 = vxpose.xlu0.b32.start [1/16] %v277, 128
      %296 = vxpose.xlu0.b32.cont [2/16] %v278, 128
      %297 = vxpose.xlu0.b32.cont [3/16] %v279, 128
      %298 = vxpose.xlu0.b32.cont [4/16] %v280, 128
      %299 = vxpose.xlu0.b32.cont [5/16] %v281, 128
      %300 = vxpose.xlu0.b32.cont [6/16] %v282, 128
      %301 = vxpose.xlu0.b32.cont [7/16] %v283, 128
      %302 = vxpose.xlu0.b32.cont [8/16] %v284, 128
      %303 = vxpose.xlu0.b32.cont [9/16] %v285, 128
      %304 = vxpose.xlu0.b32.cont [10/16] %v286, 128
      %305 = vxpose.xlu0.b32.cont [11/16] %v287, 128
      %306 = vxpose.xlu0.b32.cont [12/16] %v288, 128
      %307 = vxpose.xlu0.b32.cont [13/16] %v289, 128
      %308 = vxpose.xlu0.b32.cont [14/16] %v290, 128
      %309 = vxpose.xlu0.b32.cont [15/16] %v291, 128
      %310 = vxpose.xlu0.b32.end [16/16] %v292, 128
      %v311 = vpop.trf.xlu0
      %v312 = vpop.trf.xlu0
      %v313 = vpop.trf.xlu0
      %v314 = vpop.trf.xlu0
      %v315 = vpop.trf.xlu0
      %v316 = vpop.trf.xlu0
      %v317 = vpop.trf.xlu0
      %v318 = vpop.trf.xlu0
      %v319 = vpop.trf.xlu0
      %v320 = vpop.trf.xlu0
      %v321 = vpop.trf.xlu0
      %v322 = vpop.trf.xlu0
      %v323 = vpop.trf.xlu0
      %v324 = vpop.trf.xlu0
      %v325 = vpop.trf.xlu0
      %v326 = vpop.trf.xlu0
      %327 = vxpose.xlu0.b32.start [1/16] %v293, 128
      %328 = vxpose.xlu0.b32.cont [2/16] %v294, 128
      %329 = vxpose.xlu0.b32.cont [3/16] 0.0, 128
      %330 = vxpose.xlu0.b32.cont [4/16] 0.0, 128
      %331 = vxpose.xlu0.b32.cont [5/16] 0.0, 128
      %332 = vxpose.xlu0.b32.cont [6/16] 0.0, 128
      %333 = vxpose.xlu0.b32.cont [7/16] 0.0, 128
      %334 = vxpose.xlu0.b32.cont [8/16] 0.0, 128
      %335 = vxpose.xlu0.b32.cont [9/16] 0.0, 128
      %336 = vxpose.xlu0.b32.cont [10/16] 0.0, 128
      %337 = vxpose.xlu0.b32.cont [11/16] 0.0, 128
      %338 = vxpose.xlu0.b32.cont [12/16] 0.0, 128
      %339 = vxpose.xlu0.b32.cont [13/16] 0.0, 128
      %340 = vxpose.xlu0.b32.cont [14/16] 0.0, 128
      %341 = vxpose.xlu0.b32.cont [15/16] 0.0, 128
      %342 = vxpose.xlu0.b32.end [16/16] 0.0, 128
      %v343 = vpop.trf.xlu0
      %v344 = vpop.trf.xlu0
      %v345 = vpop.trf.xlu0
      %v346 = vpop.trf.xlu0
      %v347 = vpop.trf.xlu0
      %v348 = vpop.trf.xlu0
      %v349 = vpop.trf.xlu0
      %v350 = vpop.trf.xlu0
      %v351 = vpop.trf.xlu0
      %v352 = vpop.trf.xlu0
      %v353 = vpop.trf.xlu0
      %v354 = vpop.trf.xlu0
      %v355 = vpop.trf.xlu0
      %v356 = vpop.trf.xlu0
      %v357 = vpop.trf.xlu0
      %v358 = vpop.trf.xlu0
      %359 = vst [vmem:[#allocation2] sm:$0xff] %v311
      %360 = vst [vmem:[#allocation2 + $0x8] sm:$0x3] %v312
      %365 = vrot.lane.b32.xlu0 %v311, 127
      %v366 = vpop.permute.xlu0 %365
      %367 = vrot.lane.b32.xlu0 %v343, 127
      %v368 = vpop.permute.xlu0 %367
      %369 = vrot.lane.b32.xlu0 %v312, 127
      %v370 = vpop.permute.xlu0 %369
      %371 = vrot.lane.b32.xlu0 %v344, 127
      %v372 = vpop.permute.xlu0 %371
      %vm373 = vcmask 1039360
      %v374 = vsel %vm373, %v366, %v368
      %v375 = vsel %vm373, %v370, %v372
      %378 = vst [vmem:[#allocation2 + $0xa] sm:$0xff] %v374
      %379 = vst [vmem:[#allocation2 + $0x12] sm:$0x3] %v375
      %380 = vrot.lane.b32.xlu0 %v311, 126
      %v381 = vpop.permute.xlu0 %380
      %382 = vrot.lane.b32.xlu0 %v343, 126
      %v383 = vpop.permute.xlu0 %382
      %384 = vrot.lane.b32.xlu0 %v312, 126
      %v385 = vpop.permute.xlu0 %384
      %386 = vrot.lane.b32.xlu0 %v344, 126
      %v387 = vpop.permute.xlu0 %386
      %vm388 = vcmask 1031168
      %v389 = vsel %vm388, %v381, %v383
      %v390 = vsel %vm388, %v385, %v387
      %393 = vst [vmem:[#allocation2 + $0x14] sm:$0xff] %v389
      %394 = vst [vmem:[#allocation2 + $0x1c] sm:$0x3] %v390
      %395 = vrot.lane.b32.xlu0 %v311, 125
      %v396 = vpop.permute.xlu0 %395
      %397 = vrot.lane.b32.xlu0 %v343, 125
      %v398 = vpop.permute.xlu0 %397
      %399 = vrot.lane.b32.xlu0 %v312, 125
      %v400 = vpop.permute.xlu0 %399
      %401 = vrot.lane.b32.xlu0 %v344, 125
      %v402 = vpop.permute.xlu0 %401
      %vm403 = vcmask 1022976
      %v404 = vsel %vm403, %v396, %v398
      %v405 = vsel %vm403, %v400, %v402
      %408 = vst [vmem:[#allocation2 + $0x1e] sm:$0xff] %v404
      %409 = vst [vmem:[#allocation2 + $0x26] sm:$0x3] %v405
      %410 = vrot.lane.b32.xlu0 %v311, 124
      %v411 = vpop.permute.xlu0 %410
      %412 = vrot.lane.b32.xlu0 %v343, 124
      %v413 = vpop.permute.xlu0 %412
      %414 = vrot.lane.b32.xlu0 %v312, 124
      %v415 = vpop.permute.xlu0 %414
      %416 = vrot.lane.b32.xlu0 %v344, 124
      %v417 = vpop.permute.xlu0 %416
      %vm418 = vcmask 1014784
      %v419 = vsel %vm418, %v411, %v413
      %v420 = vsel %vm418, %v415, %v417
      %423 = vst [vmem:[#allocation2 + $0x28] sm:$0xff] %v419
      %424 = vst [vmem:[#allocation2 + $0x30] sm:$0x3] %v420
      %425 = vrot.lane.b32.xlu0 %v311, 123
      %v426 = vpop.permute.xlu0 %425
      %427 = vrot.lane.b32.xlu0 %v343, 123
      %v428 = vpop.permute.xlu0 %427
      %429 = vrot.lane.b32.xlu0 %v312, 123
      %v430 = vpop.permute.xlu0 %429
      %431 = vrot.lane.b32.xlu0 %v344, 123
      %v432 = vpop.permute.xlu0 %431
      %vm433 = vcmask 1006592
      %v434 = vsel %vm433, %v426, %v428
      %v435 = vsel %vm433, %v430, %v432
      %438 = vst [vmem:[#allocation2 + $0x32] sm:$0xff] %v434
      %439 = vst [vmem:[#allocation2 + $0x3a] sm:$0x3] %v435
      %440 = vrot.lane.b32.xlu0 %v311, 122
      %v441 = vpop.permute.xlu0 %440
      %442 = vrot.lane.b32.xlu0 %v343, 122
      %v443 = vpop.permute.xlu0 %442
      %444 = vrot.lane.b32.xlu0 %v312, 122
      %v445 = vpop.permute.xlu0 %444
      %446 = vrot.lane.b32.xlu0 %v344, 122
      %v447 = vpop.permute.xlu0 %446
      %vm448 = vcmask 998400
      %v449 = vsel %vm448, %v441, %v443
      %v450 = vsel %vm448, %v445, %v447
      %453 = vst [vmem:[#allocation2 + $0x3c] sm:$0xff] %v449
      %454 = vst [vmem:[#allocation2 + $0x44] sm:$0x3] %v450
      %455 = vrot.lane.b32.xlu0 %v311, 121
      %v456 = vpop.permute.xlu0 %455
      %457 = vrot.lane.b32.xlu0 %v343, 121
      %v458 = vpop.permute.xlu0 %457
      %459 = vrot.lane.b32.xlu0 %v312, 121
      %v460 = vpop.permute.xlu0 %459
      %461 = vrot.lane.b32.xlu0 %v344, 121
      %v462 = vpop.permute.xlu0 %461
      %vm463 = vcmask 990208
      %v464 = vsel %vm463, %v456, %v458
      %v465 = vsel %vm463, %v460, %v462
      %468 = vst [vmem:[#allocation2 + $0x46] sm:$0xff] %v464
      %469 = vst [vmem:[#allocation2 + $0x4e] sm:$0x3] %v465
      %470 = vrot.lane.b32.xlu0 %v311, 120
      %v471 = vpop.permute.xlu0 %470
      %472 = vrot.lane.b32.xlu0 %v343, 120
      %v473 = vpop.permute.xlu0 %472
      %474 = vrot.lane.b32.xlu0 %v312, 120
      %v475 = vpop.permute.xlu0 %474
      %476 = vrot.lane.b32.xlu0 %v344, 120
      %v477 = vpop.permute.xlu0 %476
      %vm478 = vcmask 982016
      %v479 = vsel %vm478, %v471, %v473
      %v480 = vsel %vm478, %v475, %v477
      %483 = vst [vmem:[#allocation2 + $0x50] sm:$0xff] %v479
      %484 = vst [vmem:[#allocation2 + $0x58] sm:$0x3] %v480
      %485 = vrot.lane.b32.xlu0 %v311, 119
      %v486 = vpop.permute.xlu0 %485
      %487 = vrot.lane.b32.xlu0 %v343, 119
      %v488 = vpop.permute.xlu0 %487
      %489 = vrot.lane.b32.xlu0 %v312, 119
      %v490 = vpop.permute.xlu0 %489
      %491 = vrot.lane.b32.xlu0 %v344, 119
      %v492 = vpop.permute.xlu0 %491
      %vm493 = vcmask 973824
      %v494 = vsel %vm493, %v486, %v488
      %v495 = vsel %vm493, %v490, %v492
      %498 = vst [vmem:[#allocation2 + $0x5a] sm:$0xff] %v494
      %499 = vst [vmem:[#allocation2 + $0x62] sm:$0x3] %v495
      %500 = vrot.lane.b32.xlu0 %v311, 118
      %v501 = vpop.permute.xlu0 %500
      %502 = vrot.lane.b32.xlu0 %v343, 118
      %v503 = vpop.permute.xlu0 %502
      %504 = vrot.lane.b32.xlu0 %v312, 118
      %v505 = vpop.permute.xlu0 %504
      %506 = vrot.lane.b32.xlu0 %v344, 118
      %v507 = vpop.permute.xlu0 %506
      %vm508 = vcmask 965632
      %v509 = vsel %vm508, %v501, %v503
      %v510 = vsel %vm508, %v505, %v507
      %513 = vst [vmem:[#allocation2 + $0x64] sm:$0xff] %v509
      %514 = vst [vmem:[#allocation2 + $0x6c] sm:$0x3] %v510
      %515 = vrot.lane.b32.xlu0 %v311, 117
      %v516 = vpop.permute.xlu0 %515
      %517 = vrot.lane.b32.xlu0 %v343, 117
      %v518 = vpop.permute.xlu0 %517
      %519 = vrot.lane.b32.xlu0 %v312, 117
      %v520 = vpop.permute.xlu0 %519
      %521 = vrot.lane.b32.xlu0 %v344, 117
      %v522 = vpop.permute.xlu0 %521
      %vm523 = vcmask 957440
      %v524 = vsel %vm523, %v516, %v518
      %v525 = vsel %vm523, %v520, %v522
      %528 = vst [vmem:[#allocation2 + $0x6e] sm:$0xff] %v524
      %529 = vst [vmem:[#allocation2 + $0x76] sm:$0x3] %v525
      %530 = vrot.lane.b32.xlu0 %v311, 116
      %v531 = vpop.permute.xlu0 %530
      %532 = vrot.lane.b32.xlu0 %v343, 116
      %v533 = vpop.permute.xlu0 %532
      %534 = vrot.lane.b32.xlu0 %v312, 116
      %v535 = vpop.permute.xlu0 %534
      %536 = vrot.lane.b32.xlu0 %v344, 116
      %v537 = vpop.permute.xlu0 %536
      %vm538 = vcmask 949248
      %v539 = vsel %vm538, %v531, %v533
      %v540 = vsel %vm538, %v535, %v537
      %543 = vst [vmem:[#allocation2 + $0x78] sm:$0xff] %v539
      %544 = vst [vmem:[#allocation2 + $0x80] sm:$0x3] %v540
      %545 = vrot.lane.b32.xlu0 %v311, 115
      %v546 = vpop.permute.xlu0 %545
      %547 = vrot.lane.b32.xlu0 %v343, 115
      %v548 = vpop.permute.xlu0 %547
      %549 = vrot.lane.b32.xlu0 %v312, 115
      %v550 = vpop.permute.xlu0 %549
      %551 = vrot.lane.b32.xlu0 %v344, 115
      %v552 = vpop.permute.xlu0 %551
      %vm553 = vcmask 941056
      %v554 = vsel %vm553, %v546, %v548
      %v555 = vsel %vm553, %v550, %v552
      %558 = vst [vmem:[#allocation2 + $0x82] sm:$0xff] %v554
      %559 = vst [vmem:[#allocation2 + $0x8a] sm:$0x3] %v555
      %560 = vrot.lane.b32.xlu0 %v311, 114
      %v561 = vpop.permute.xlu0 %560
      %562 = vrot.lane.b32.xlu0 %v343, 114
      %v563 = vpop.permute.xlu0 %562
      %564 = vrot.lane.b32.xlu0 %v312, 114
      %v565 = vpop.permute.xlu0 %564
      %566 = vrot.lane.b32.xlu0 %v344, 114
      %v567 = vpop.permute.xlu0 %566
      %vm568 = vcmask 932864
      %v569 = vsel %vm568, %v561, %v563
      %v570 = vsel %vm568, %v565, %v567
      %573 = vst [vmem:[#allocation2 + $0x8c] sm:$0xff] %v569
      %574 = vst [vmem:[#allocation2 + $0x94] sm:$0x3] %v570
      %575 = vrot.lane.b32.xlu0 %v311, 113
      %v576 = vpop.permute.xlu0 %575
      %577 = vrot.lane.b32.xlu0 %v343, 113
      %v578 = vpop.permute.xlu0 %577
      %579 = vrot.lane.b32.xlu0 %v312, 113
      %v580 = vpop.permute.xlu0 %579
      %581 = vrot.lane.b32.xlu0 %v344, 113
      %v582 = vpop.permute.xlu0 %581
      %vm583 = vcmask 924672
      %v584 = vsel %vm583, %v576, %v578
      %v585 = vsel %vm583, %v580, %v582
      %588 = vst [vmem:[#allocation2 + $0x96] sm:$0xff] %v584
      %589 = vst [vmem:[#allocation2 + $0x9e] sm:$0x3] %v585
      %590 = vrot.lane.b32.xlu0 %v311, 112
      %v591 = vpop.permute.xlu0 %590
      %592 = vrot.lane.b32.xlu0 %v343, 112
      %v593 = vpop.permute.xlu0 %592
      %594 = vrot.lane.b32.xlu0 %v312, 112
      %v595 = vpop.permute.xlu0 %594
      %596 = vrot.lane.b32.xlu0 %v344, 112
      %v597 = vpop.permute.xlu0 %596
      %vm598 = vcmask 916480
      %v599 = vsel %vm598, %v591, %v593
      %v600 = vsel %vm598, %v595, %v597
      %603 = vst [vmem:[#allocation2 + $0xa0] sm:$0xff] %v599
      %604 = vst [vmem:[#allocation2 + $0xa8] sm:$0x3] %v600
      %v605 = vld [vmem:[%s2] sm:$0xff]
      %v606 = vld [vmem:[%s2 + $0x8] sm:$0xff]
      %v607 = vld [vmem:[%s2 + $0x10] sm:$0x1]
      %v608 = vld [vmem:[%s2 + $0x18] sm:$0x1]
      %v609 = vld [vmem:[#allocation2] sm:$0xff]
      %v610 = vld [vmem:[#allocation2 + $0x8] sm:$0xff]
      %v611 = vld [vmem:[#allocation2 + $0x10] sm:$0xff]
      %v612 = vld [vmem:[#allocation2 + $0x18] sm:$0xff]
      %v613 = vld [vmem:[#allocation2 + $0x20] sm:$0xff]
      %v614 = vld [vmem:[#allocation2 + $0x28] sm:$0xff]
      %v615 = vld [vmem:[#allocation2 + $0x30] sm:$0xff]
      %v616 = vld [vmem:[#allocation2 + $0x38] sm:$0xff]
      %v617 = vld [vmem:[#allocation2 + $0x40] sm:$0xff]
      %v618 = vld [vmem:[#allocation2 + $0x48] sm:$0xff]
      %v619 = vld [vmem:[#allocation2 + $0x50] sm:$0xff]
      %v620 = vld [vmem:[#allocation2 + $0x58] sm:$0xff]
      %v621 = vld [vmem:[#allocation2 + $0x60] sm:$0xff]
      %v622 = vld [vmem:[#allocation2 + $0x68] sm:$0xff]
      %v623 = vld [vmem:[#allocation2 + $0x70] sm:$0xff]
      %v624 = vld [vmem:[#allocation2 + $0x78] sm:$0xff]
      %v625 = vld [vmem:[#allocation2 + $0x80] sm:$0xff]
      %v626 = vld [vmem:[#allocation2 + $0x88] sm:$0xff]
      %v627 = vld [vmem:[#allocation2 + $0x90] sm:$0xff]
      %v628 = vld [vmem:[#allocation2 + $0x98] sm:$0xff]
      %v629 = vld [vmem:[#allocation2 + $0xa0] sm:$0xff]
      %v630 = vld [vmem:[#allocation2 + $0xa8] sm:$0x3]
      %vm631 = vcmask 343040
      %v633 = vsel %vm631, %v606, 0
      %v636 = vsel %vm631, %v608, 0
      %vm638 = vcmask 1041408
      %v640 = vsel %vm638, %v630, 0
      %642 = vmatpush.msra.mxu0 %v624
      %643 = vmatpush.msra.mxu0 %v623
      %644 = vmatpush.msra.mxu0 %v622
      %645 = vmatpush.msra.mxu0 %v621
      %646 = vmatpush.msra.mxu0 %v620
      %647 = vmatpush.msra.mxu0 %v619
      %648 = vmatpush.msra.mxu0 %v618
      %649 = vmatpush.msra.mxu0 %v617
      %650 = vmatpush.msra.mxu0 %v616
      %651 = vmatpush.msra.mxu0 %v615
      %652 = vmatpush.msra.mxu0 %v614
      %653 = vmatpush.msra.mxu0 %v613
      %654 = vmatpush.msra.mxu0 %v612
      %655 = vmatpush.msra.mxu0 %v611
      %656 = vmatpush.msra.mxu0 %v610
      %657 = vmatpush.msra.mxu0 %v609
      %658 = vmatmul.f32.gmra.mxu0 %v605
      %v659 = vpop.f32.mrf.mxu0
      %v660 = vadd.f32 0.0, %v659
      %661 = vmatmul.f32.gmra.mxu0 %v607
      %v662 = vpop.f32.mrf.mxu0
      %v663 = vadd.f32 0.0, %v662
      %664 = vdwg.mxu0
      %665 = vmatpush.msra.mxu0 0.0
      %666 = vmatpush.msra.mxu0 0.0
      %667 = vmatpush.msra.mxu0 0.0
      %668 = vmatpush.msra.mxu0 0.0
      %669 = vmatpush.msra.mxu0 0.0
      %670 = vmatpush.msra.mxu0 0.0
      %671 = vmatpush.msra.mxu0 0.0
      %672 = vmatpush.msra.mxu0 0.0
      %673 = vmatpush.msra.mxu0 0.0
      %674 = vmatpush.msra.mxu0 0.0
      %675 = vmatpush.msra.mxu0 %v640
      %676 = vmatpush.msra.mxu0 %v629
      %677 = vmatpush.msra.mxu0 %v628
      %678 = vmatpush.msra.mxu0 %v627
      %679 = vmatpush.msra.mxu0 %v626
      %680 = vmatpush.msra.mxu0 %v625
      %681 = vmatmul.f32.gmra.mxu0 %v633
      %v682 = vpop.f32.mrf.mxu0
      %v683 = vadd.f32 %v660, %v682
      %684 = vmatmul.f32.gmra.mxu0 %v636
      %v685 = vpop.f32.mrf.mxu0
      %v686 = vadd.f32 %v663, %v685
      %687 = vdwg.mxu0
      %688 = vst [vmem:[%s276] sm:$0xff] %v683
      %689 = vst [vmem:[%s276 + $0x8] sm:$0x1] %v686
      %p690 = scmp.lt.s32.totalorder %s18, 1
      %s691 = scalar_select %p690, %s18, 1
      %p692 = scmp.lt.s32.totalorder %s19, 0
      %s693 = scalar_select %p692, %s19, 0
      %s694 = smul.addr %s691, 2
      %s695 = sadd.s32 %s693, %s694
      %s696 = smul.addr %s695, 8
      %s697 = scalar_lea.vmem %s3, %s696
      // Predicated region
      $region33: #{tpu_custom_call.1} parent=31 // pred_check
        %p698 = pneg %p127
      $region34: #{tpu_custom_call.1} parent=31 // pred_check_branch
        %700 = sbr.rel (%p698) target = $region36
      $region35: #{tpu_custom_call.1} parent=31 // pred_region
        _
      $region36: #{tpu_custom_call.1} parent=31 // pred_fallthru
        _
    $region32: #{tpu_custom_call.1} parent=5 // pred_fallthru
      _
    %p701 = scmp.le.s32.totalorder 2, %s9
    // Predicated region
    $region37: #{tpu_custom_call.1} parent=5 // pred_check
      %p702 = pneg %p701
    $region38: #{tpu_custom_call.1} parent=5 // pred_check_branch
      %704 = sbr.rel (%p702) target = $region40
    $region39: #{tpu_custom_call.1} parent=5 // pred_region
      %s705 = ssub.s32 %s9, 2
      // Predicated region
      $region41: #{tpu_custom_call.1} parent=39 // pred_check
        %p706 = pneg %p133
      $region42: #{tpu_custom_call.1} parent=39 // pred_check_branch
        %708 = sbr.rel (%p706) target = $region44
      $region43: #{tpu_custom_call.1} parent=39 // pred_region
        %p709 = scmp.lt.s32.totalorder %s20, 1
        %s710 = scalar_select %p709, %s20, 1
        %p711 = scmp.lt.s32.totalorder %s21, 0
        %s712 = scalar_select %p711, %s21, 0
        %s713 = smul.addr %s710, 2
        %s714 = sadd.s32 %s712, %s713
        %s715 = smul.addr %s714, 8
        %s716 = scalar_lea.vmem %s3, %s715
      $region44: #{tpu_custom_call.1} parent=39 // pred_fallthru
        _
    $region40: #{tpu_custom_call.1} parent=5 // pred_fallthru
      _
  $region6: #{tpu_custom_call.1} parent=0 // loop_footer
    %s13 = sadd.s32 1, %s9
  $region7: #{tpu_custom_call.1} parent=0 // loop_footer_branch
    %8 = sbr.rel target = $region3
  $region8: #{tpu_custom_call.1} parent=0 // loop_exit
    _

</llo_original>
